<compile_context>
chip_gen: v7x
topology: tpu7x:2x2x1
jax: 0.10.0
libtpu: 0.0.40
codegen_flags: <defaults>
</compile_context>

<pallas_src>
import functools

import numpy as np
import jax
import jax.numpy as jnp
from jax.experimental import pallas as pl
from jax.experimental.pallas import tpu as pltpu


# ----------------------------------------------------------------------------
# Anchor generation (deterministic init-time setup, plain numpy).
# ----------------------------------------------------------------------------
def _whctrs(anchor):
    w = anchor[2] - anchor[0] + 1
    h = anchor[3] - anchor[1] + 1
    x_ctr = anchor[0] + 0.5 * (w - 1)
    y_ctr = anchor[1] + 0.5 * (h - 1)
    return w, h, x_ctr, y_ctr


def _mkanchors(ws, hs, x_ctr, y_ctr):
    ws = ws[:, None]
    hs = hs[:, None]
    return np.hstack((x_ctr - 0.5 * (ws - 1), y_ctr - 0.5 * (hs - 1),
                      x_ctr + 0.5 * (ws - 1), y_ctr + 0.5 * (hs - 1)))


def _ratio_enum(anchor, ratios):
    w, h, x_ctr, y_ctr = _whctrs(anchor)
    size = w * h
    size_ratios = size / ratios
    ws = np.round(np.sqrt(size_ratios))
    hs = np.round(ws * ratios)
    return _mkanchors(ws, hs, x_ctr, y_ctr)


def _scale_enum(anchor, scales):
    w, h, x_ctr, y_ctr = _whctrs(anchor)
    ws = w * scales
    hs = h * scales
    return _mkanchors(ws, hs, x_ctr, y_ctr)


def generate_anchors(base_size=16, ratios=(0.5, 1, 2), scales=(8, 16, 32)):
    ratios = np.asarray(ratios, dtype=np.float32)
    scales = np.asarray(scales, dtype=np.float32)
    base_anchor = np.array([0, 0, base_size - 1, base_size - 1], dtype=np.float32)
    ratio_anchors = _ratio_enum(base_anchor, ratios)
    anchors = np.vstack([_scale_enum(ratio_anchors[i], scales)
                         for i in range(ratio_anchors.shape[0])])
    return anchors.astype(np.float32)


# ----------------------------------------------------------------------------
# Layout helpers: box index -> (sublane-row, lane) planes.
# ----------------------------------------------------------------------------
_LANES = 128
_MAX_ROWS_PER_BLOCK = 32        # 32 sublane-rows * 128 lanes = 4096 boxes/block


def _layout_params(n_boxes):
    """(rows_per_block, padded box count) for the (rows, 128) plane layout."""
    rows = pl.cdiv(n_boxes, _LANES)
    rows8 = ((rows + 7) // 8) * 8                     # sublane multiple of 8
    rows_per_block = min(_MAX_ROWS_PER_BLOCK, rows8)
    rows_pad = ((rows8 + rows_per_block - 1) // rows_per_block) * rows_per_block
    return rows_per_block, rows_pad * _LANES


# ----------------------------------------------------------------------------
# Pallas kernel: decode + clip + min-size filter fused into a masked score.
# ----------------------------------------------------------------------------
def _make_proposal_kernel(n_valid, rows_per_block):
    def kernel(params_ref, anc_ref, dlt_ref, sc_ref, prop_ref, msc_ref):
        # params_ref: SMEM f32[3] = [im_height, im_width, min_size * im_scale]
        # anc_ref / dlt_ref: VMEM (4, rows_per_block, 128) coordinate planes
        # sc_ref   : VMEM (rows_per_block, 128) fg scores
        # prop_ref : VMEM (4, rows_per_block, 128) clipped proposals
        # msc_ref  : VMEM (rows_per_block, 128) score if kept else -inf
        im_h = params_ref[0]
        im_w = params_ref[1]
        min_sz = params_ref[2]

        ax1 = anc_ref[0]
        ay1 = anc_ref[1]
        ax2 = anc_ref[2]
        ay2 = anc_ref[3]
        dx = dlt_ref[0]
        dy = dlt_ref[1]
        dw = dlt_ref[2]
        dh = dlt_ref[3]

        widths = ax2 - ax1 + 1.0
        heights = ay2 - ay1 + 1.0
        ctr_x = ax1 + 0.5 * widths
        ctr_y = ay1 + 0.5 * heights

        pred_ctr_x = dx * widths + ctr_x
        pred_ctr_y = dy * heights + ctr_y
        pred_w = jnp.exp(dw) * widths
        pred_h = jnp.exp(dh) * heights

        # clip_boxes (forward passes im_info with scale 1.0)
        x1 = jnp.clip(pred_ctr_x - 0.5 * pred_w, 0.0, im_w - 1.0)
        y1 = jnp.clip(pred_ctr_y - 0.5 * pred_h, 0.0, im_h - 1.0)
        x2 = jnp.clip(pred_ctr_x + 0.5 * pred_w, 0.0, im_w - 1.0)
        y2 = jnp.clip(pred_ctr_y + 0.5 * pred_h, 0.0, im_h - 1.0)

        prop_ref[0] = x1
        prop_ref[1] = y1
        prop_ref[2] = x2
        prop_ref[3] = y2

        # _filter_boxes fused with score masking: dropped / padded -> -inf.
        ws = x2 - x1 + 1.0
        hs = y2 - y1 + 1.0
        blk = pl.program_id(0)
        row = jax.lax.broadcasted_iota(jnp.int32, ws.shape, 0)
        lane = jax.lax.broadcasted_iota(jnp.int32, ws.shape, 1)
        gidx = (blk * rows_per_block + row) * _LANES + lane
        keep = (ws >= min_sz) & (hs >= min_sz) & (gidx < n_valid)
        msc_ref[...] = jnp.where(keep, sc_ref[...], -jnp.inf)

    return kernel


@functools.partial(jax.jit, static_argnames=("min_size", "pre_nms_topn"))
def _proposal_device(anchor_planes, scores, bbox_deltas, im_info, *,
                     min_size, pre_nms_topn):
    """Decode/clip/filter on TPU, then device-side top-k of masked scores."""
    _, a4, h, w = bbox_deltas.shape
    a = a4 // 4
    n = h * w * a
    rows_per_block, n_pad = _layout_params(n)
    rows = n_pad // _LANES

    fg = scores[:, a:, :, :]                                     # (1, A, H, W)
    deltas = jnp.transpose(bbox_deltas, (0, 2, 3, 1)).reshape(-1, 4)
    sc = jnp.transpose(fg, (0, 2, 3, 1)).reshape(-1)

    deltas_planes = jnp.pad(deltas, ((0, n_pad - n), (0, 0))).T.reshape(
        4, rows, _LANES)
    sc_planes = jnp.pad(sc, (0, n_pad - n)).reshape(rows, _LANES)

    # im_h, im_w, min_size*im_scale stay on device (no host sync of im_info).
    params = jnp.stack([im_info[0, 0], im_info[0, 1],
                        min_size * im_info[0, 2]]).astype(jnp.float32)

    kernel = _make_proposal_kernel(n, rows_per_block)
    prop_planes, masked_sc = pl.pallas_call(
        kernel,
        out_shape=(jax.ShapeDtypeStruct((4, rows, _LANES), jnp.float32),
                   jax.ShapeDtypeStruct((rows, _LANES), jnp.float32)),
        grid=(rows // rows_per_block,),
        in_specs=[
            pl.BlockSpec(memory_space=pltpu.MemorySpace.SMEM),       # params
            pl.BlockSpec((4, rows_per_block, _LANES), lambda i: (0, i, 0)),
            pl.BlockSpec((4, rows_per_block, _LANES), lambda i: (0, i, 0)),
            pl.BlockSpec((rows_per_block, _LANES), lambda i: (i, 0)),
        ],
        out_specs=(
            pl.BlockSpec((4, rows_per_block, _LANES), lambda i: (0, i, 0)),
            pl.BlockSpec((rows_per_block, _LANES), lambda i: (i, 0)),
        ),
        compiler_params=pltpu.CompilerParams(
            dimension_semantics=("parallel",)),
    )(params, anchor_planes, deltas_planes, sc_planes)

    proposals_flat = prop_planes.reshape(4, n_pad).T             # (n_pad, 4)
    scores_flat = masked_sc.reshape(n_pad)

    k = n_pad if pre_nms_topn <= 0 else min(pre_nms_topn, n_pad)
    top_scores, top_idx = jax.lax.top_k(scores_flat, k)
    top_props = jnp.take(proposals_flat, top_idx, axis=0)
    return top_props, top_scores


# ----------------------------------------------------------------------------
# Greedy NMS (data-dependent sequential -> host-side numpy).
# ----------------------------------------------------------------------------
def nms_numpy(boxes, scores, thresh):
    if boxes.shape[0] == 0:
        return np.zeros((0,), dtype=np.int64)
    x1, y1, x2, y2 = boxes[:, 0], boxes[:, 1], boxes[:, 2], boxes[:, 3]
    areas = (x2 - x1 + 1.0) * (y2 - y1 + 1.0)
    order = scores.argsort()[::-1]
    keep = []
    while order.size > 0:
        i = order[0]
        keep.append(i)
        xx1 = np.maximum(x1[i], x1[order[1:]])
        yy1 = np.maximum(y1[i], y1[order[1:]])
        xx2 = np.minimum(x2[i], x2[order[1:]])
        yy2 = np.minimum(y2[i], y2[order[1:]])
        w = np.maximum(0.0, xx2 - xx1 + 1.0)
        h = np.maximum(0.0, yy2 - yy1 + 1.0)
        inter = w * h
        iou = inter / (areas[i] + areas[order[1:]] - inter)
        inds = np.where(iou <= thresh)[0]
        order = order[inds + 1]
    return np.asarray(keep, dtype=np.int64)


# ----------------------------------------------------------------------------
# ProposalLayer (JAX/Pallas version of the PyTorch module).
# ----------------------------------------------------------------------------
class ProposalLayer:
    def __init__(self, feat_stride, anchor_scales=(8, 16, 32),
                 anchor_ratios=(0.5, 1, 2), pre_nms_topN=12000,
                 post_nms_topN=2000, nms_thresh=0.7, min_size=16):
        self._feat_stride = feat_stride
        self._anchors_np = generate_anchors(
            scales=np.asarray(anchor_scales, np.float32),
            ratios=np.asarray(anchor_ratios, np.float32))
        self._num_anchors = self._anchors_np.shape[0]
        self._pre_nms_topN = pre_nms_topN
        self._post_nms_topN = post_nms_topN
        self._nms_thresh = nms_thresh
        self._min_size = min_size
        self._anchor_cache = {}   # (H, W) -> (4, rows, 128) device planes

    def _anchor_planes(self, H, W):
        key = (H, W)
        planes = self._anchor_cache.get(key)
        if planes is None:
            A = self._num_anchors
            shift_x = np.arange(W, dtype=np.float32) * self._feat_stride
            shift_y = np.arange(H, dtype=np.float32) * self._feat_stride
            sy, sx = np.meshgrid(shift_y, shift_x, indexing="ij")
            shifts = np.stack((sx.ravel(), sy.ravel(), sx.ravel(), sy.ravel()),
                              axis=1)
            K = shifts.shape[0]
            anchors = (self._anchors_np.reshape(1, A, 4)
                       + shifts.reshape(K, 1, 4)).reshape(K * A, 4)
            n = anchors.shape[0]
            _, n_pad = _layout_params(n)
            anchors = np.pad(anchors, ((0, n_pad - n), (0, 0)))
            planes = jnp.asarray(
                anchors.T.reshape(4, n_pad // _LANES, _LANES).astype(np.float32))
            self._anchor_cache[key] = planes
        return planes

    def __call__(self, scores, bbox_deltas, im_info):
        assert scores.shape[0] == 1, "Only single item batches are supported"
        H, W = scores.shape[-2:]
        anchor_planes = self._anchor_planes(H, W)

        # Device hot path: decode + clip + filter + score mask + top-k.
        top_props, top_scores = _proposal_device(
            anchor_planes, scores, bbox_deltas, im_info,
            min_size=float(self._min_size),
            pre_nms_topn=int(self._pre_nms_topN))

        # TODO(synk): greedy NMS is sequential and data-dependent (dynamic
        # output shape) -> host-side numpy; only pre-NMS top-k rows leave device.
        props_np = np.asarray(jax.device_get(top_props))
        scores_np = np.asarray(jax.device_get(top_scores))
        valid = np.isfinite(scores_np)          # drop filtered / padded (-inf)
        props_np = props_np[valid]
        scores_np = scores_np[valid]

        keep = nms_numpy(props_np, scores_np, self._nms_thresh)
        if self._post_nms_topN > 0:
            keep = keep[: self._post_nms_topN]
        props_np = props_np[keep]
        scores_np = scores_np[keep]
        # (reference module dumps .npy debug files here — intentionally skipped)

        batch_inds = np.zeros((props_np.shape[0], 1), dtype=np.float32)
        rois = np.concatenate((batch_inds, props_np), axis=1)
        return jnp.asarray(rois), jnp.asarray(scores_np.reshape(-1, 1))


if __name__ == "__main__":
    key = jax.random.PRNGKey(0)
    A = 9                      # 3 scales x 3 ratios
    H = W = 8                  # small feature map
    feat_stride = 16

    k1, k2 = jax.random.split(key)
    # PyTorch conv layout NCHW: scores (1, 2A, H, W), deltas (1, 4A, H, W)
    scores = jax.random.normal(k1, (1, 2 * A, H, W), dtype=jnp.float32)
    bbox_deltas = 0.1 * jax.random.normal(k2, (1, 4 * A, H, W), dtype=jnp.float32)
    im_info = jnp.array([[H * feat_stride, W * feat_stride, 1.0]],
                        dtype=jnp.float32)

    layer = ProposalLayer(feat_stride=feat_stride, pre_nms_topN=300,
                          post_nms_topN=50, nms_thresh=0.7, min_size=16)
    rois, roi_scores = layer(scores, bbox_deltas, im_info)
    jax.block_until_ready(rois)
    jax.block_until_ready(roi_scores)

    assert rois.ndim == 2 and rois.shape[1] == 5
    assert roi_scores.ndim == 2 and roi_scores.shape[1] == 1
    assert rois.shape[0] == roi_scores.shape[0]
    print("KERNEL_OK")
</pallas_src>

<mosaic_0001>
module attributes {stable_mosaic.version = 11 : i64} {
  func.func @kernel(%arg0: i32, %arg1: memref<3xf32, #tpu.memory_space<smem>>, %arg2: memref<4x8x128xf32, #tpu.memory_space<vmem>>, %arg3: memref<4x8x128xf32, #tpu.memory_space<vmem>>, %arg4: memref<8x128xf32, #tpu.memory_space<vmem>>, %arg5: memref<4x8x128xf32, #tpu.memory_space<vmem>>, %arg6: memref<8x128xf32, #tpu.memory_space<vmem>>) attributes {dimension_semantics = [#tpu.dimension_semantics<parallel>], iteration_bounds = array<i64: 1>, scalar_prefetch = 0 : i64, scratch_operands = 0 : i64, tpu.core_type = #tpu.core_type<tc>, window_params = [{transform_indices = @transform_0, window_bounds = array<i64: 3>}, {transform_indices = @transform_1, window_bounds = array<i64: 4, 8, 128>}, {transform_indices = @transform_2, window_bounds = array<i64: 4, 8, 128>}, {transform_indices = @transform_3, window_bounds = array<i64: 8, 128>}, {transform_indices = @transform_4, window_bounds = array<i64: 4, 8, 128>}, {transform_indices = @transform_5, window_bounds = array<i64: 8, 128>}]} {
    %c0 = arith.constant 0 : index
    %0 = memref.load %arg1[%c0] : memref<3xf32, #tpu.memory_space<smem>>
    %c1 = arith.constant 1 : index
    %1 = memref.load %arg1[%c1] : memref<3xf32, #tpu.memory_space<smem>>
    %c2 = arith.constant 2 : index
    %2 = memref.load %arg1[%c2] : memref<3xf32, #tpu.memory_space<smem>>
    %c0_0 = arith.constant 0 : index
    %c0_1 = arith.constant 0 : index
    %c0_2 = arith.constant 0 : index
    %3 = vector.load %arg2[%c0_0, %c0_1, %c0_2] : memref<4x8x128xf32, #tpu.memory_space<vmem>>, vector<1x8x128xf32>
    %4 = vector.shape_cast %3 : vector<1x8x128xf32> to vector<8x128xf32>
    %c1_3 = arith.constant 1 : index
    %c0_4 = arith.constant 0 : index
    %c0_5 = arith.constant 0 : index
    %5 = vector.load %arg2[%c1_3, %c0_4, %c0_5] : memref<4x8x128xf32, #tpu.memory_space<vmem>>, vector<1x8x128xf32>
    %6 = vector.shape_cast %5 : vector<1x8x128xf32> to vector<8x128xf32>
    %c2_6 = arith.constant 2 : index
    %c0_7 = arith.constant 0 : index
    %c0_8 = arith.constant 0 : index
    %7 = vector.load %arg2[%c2_6, %c0_7, %c0_8] : memref<4x8x128xf32, #tpu.memory_space<vmem>>, vector<1x8x128xf32>
    %8 = vector.shape_cast %7 : vector<1x8x128xf32> to vector<8x128xf32>
    %c3 = arith.constant 3 : index
    %c0_9 = arith.constant 0 : index
    %c0_10 = arith.constant 0 : index
    %9 = vector.load %arg2[%c3, %c0_9, %c0_10] : memref<4x8x128xf32, #tpu.memory_space<vmem>>, vector<1x8x128xf32>
    %10 = vector.shape_cast %9 : vector<1x8x128xf32> to vector<8x128xf32>
    %c0_11 = arith.constant 0 : index
    %c0_12 = arith.constant 0 : index
    %c0_13 = arith.constant 0 : index
    %11 = vector.load %arg3[%c0_11, %c0_12, %c0_13] : memref<4x8x128xf32, #tpu.memory_space<vmem>>, vector<1x8x128xf32>
    %12 = vector.shape_cast %11 : vector<1x8x128xf32> to vector<8x128xf32>
    %c1_14 = arith.constant 1 : index
    %c0_15 = arith.constant 0 : index
    %c0_16 = arith.constant 0 : index
    %13 = vector.load %arg3[%c1_14, %c0_15, %c0_16] : memref<4x8x128xf32, #tpu.memory_space<vmem>>, vector<1x8x128xf32>
    %14 = vector.shape_cast %13 : vector<1x8x128xf32> to vector<8x128xf32>
    %c2_17 = arith.constant 2 : index
    %c0_18 = arith.constant 0 : index
    %c0_19 = arith.constant 0 : index
    %15 = vector.load %arg3[%c2_17, %c0_18, %c0_19] : memref<4x8x128xf32, #tpu.memory_space<vmem>>, vector<1x8x128xf32>
    %16 = vector.shape_cast %15 : vector<1x8x128xf32> to vector<8x128xf32>
    %c3_20 = arith.constant 3 : index
    %c0_21 = arith.constant 0 : index
    %c0_22 = arith.constant 0 : index
    %17 = vector.load %arg3[%c3_20, %c0_21, %c0_22] : memref<4x8x128xf32, #tpu.memory_space<vmem>>, vector<1x8x128xf32>
    %18 = vector.shape_cast %17 : vector<1x8x128xf32> to vector<8x128xf32>
    %19 = arith.subf %8, %4 : vector<8x128xf32>
    %cst = arith.constant 1.000000e+00 : f32
    %20 = vector.broadcast %cst : f32 to vector<8x128xf32>
    %21 = arith.addf %19, %20 : vector<8x128xf32>
    %22 = arith.subf %10, %6 : vector<8x128xf32>
    %cst_23 = arith.constant 1.000000e+00 : f32
    %23 = vector.broadcast %cst_23 : f32 to vector<8x128xf32>
    %24 = arith.addf %22, %23 : vector<8x128xf32>
    %cst_24 = arith.constant 5.000000e-01 : f32
    %25 = vector.broadcast %cst_24 : f32 to vector<8x128xf32>
    %26 = arith.mulf %25, %21 : vector<8x128xf32>
    %27 = arith.addf %4, %26 : vector<8x128xf32>
    %cst_25 = arith.constant 5.000000e-01 : f32
    %28 = vector.broadcast %cst_25 : f32 to vector<8x128xf32>
    %29 = arith.mulf %28, %24 : vector<8x128xf32>
    %30 = arith.addf %6, %29 : vector<8x128xf32>
    %31 = arith.mulf %12, %21 : vector<8x128xf32>
    %32 = arith.addf %31, %27 : vector<8x128xf32>
    %33 = arith.mulf %14, %24 : vector<8x128xf32>
    %34 = arith.addf %33, %30 : vector<8x128xf32>
    %35 = math.exp %16 : vector<8x128xf32>
    %36 = arith.mulf %35, %21 : vector<8x128xf32>
    %37 = math.exp %18 : vector<8x128xf32>
    %38 = arith.mulf %37, %24 : vector<8x128xf32>
    %cst_26 = arith.constant 5.000000e-01 : f32
    %39 = vector.broadcast %cst_26 : f32 to vector<8x128xf32>
    %40 = arith.mulf %39, %36 : vector<8x128xf32>
    %41 = arith.subf %32, %40 : vector<8x128xf32>
    %cst_27 = arith.constant 1.000000e+00 : f32
    %42 = arith.subf %1, %cst_27 : f32
    %cst_28 = arith.constant 0.000000e+00 : f32
    %43 = vector.broadcast %cst_28 : f32 to vector<8x128xf32>
    %44 = arith.maximumf %43, %41 : vector<8x128xf32>
    %45 = vector.broadcast %42 : f32 to vector<8x128xf32>
    %46 = arith.minimumf %45, %44 : vector<8x128xf32>
    %cst_29 = arith.constant 5.000000e-01 : f32
    %47 = vector.broadcast %cst_29 : f32 to vector<8x128xf32>
    %48 = arith.mulf %47, %38 : vector<8x128xf32>
    %49 = arith.subf %34, %48 : vector<8x128xf32>
    %cst_30 = arith.constant 1.000000e+00 : f32
    %50 = arith.subf %0, %cst_30 : f32
    %cst_31 = arith.constant 0.000000e+00 : f32
    %51 = vector.broadcast %cst_31 : f32 to vector<8x128xf32>
    %52 = arith.maximumf %51, %49 : vector<8x128xf32>
    %53 = vector.broadcast %50 : f32 to vector<8x128xf32>
    %54 = arith.minimumf %53, %52 : vector<8x128xf32>
    %cst_32 = arith.constant 5.000000e-01 : f32
    %55 = vector.broadcast %cst_32 : f32 to vector<8x128xf32>
    %56 = arith.mulf %55, %36 : vector<8x128xf32>
    %57 = arith.addf %32, %56 : vector<8x128xf32>
    %cst_33 = arith.constant 1.000000e+00 : f32
    %58 = arith.subf %1, %cst_33 : f32
    %cst_34 = arith.constant 0.000000e+00 : f32
    %59 = vector.broadcast %cst_34 : f32 to vector<8x128xf32>
    %60 = arith.maximumf %59, %57 : vector<8x128xf32>
    %61 = vector.broadcast %58 : f32 to vector<8x128xf32>
    %62 = arith.minimumf %61, %60 : vector<8x128xf32>
    %cst_35 = arith.constant 5.000000e-01 : f32
    %63 = vector.broadcast %cst_35 : f32 to vector<8x128xf32>
    %64 = arith.mulf %63, %38 : vector<8x128xf32>
    %65 = arith.addf %34, %64 : vector<8x128xf32>
    %cst_36 = arith.constant 1.000000e+00 : f32
    %66 = arith.subf %0, %cst_36 : f32
    %cst_37 = arith.constant 0.000000e+00 : f32
    %67 = vector.broadcast %cst_37 : f32 to vector<8x128xf32>
    %68 = arith.maximumf %67, %65 : vector<8x128xf32>
    %69 = vector.broadcast %66 : f32 to vector<8x128xf32>
    %70 = arith.minimumf %69, %68 : vector<8x128xf32>
    %c0_38 = arith.constant 0 : index
    %c0_39 = arith.constant 0 : index
    %c0_40 = arith.constant 0 : index
    %71 = vector.load %arg5[%c0_38, %c0_39, %c0_40] : memref<4x8x128xf32, #tpu.memory_space<vmem>>, vector<1x8x128xf32>
    %72 = vector.shape_cast %71 : vector<1x8x128xf32> to vector<8x128xf32>
    %73 = vector.shape_cast %46 : vector<8x128xf32> to vector<1x8x128xf32>
    tpu.vector_store %arg5[%c0_38, %c0_39, %c0_40], %73 {strides = array<i32>} : memref<4x8x128xf32, #tpu.memory_space<vmem>>, vector<1x8x128xf32>,
    %c1_41 = arith.constant 1 : index
    %c0_42 = arith.constant 0 : index
    %c0_43 = arith.constant 0 : index
    %74 = vector.load %arg5[%c1_41, %c0_42, %c0_43] : memref<4x8x128xf32, #tpu.memory_space<vmem>>, vector<1x8x128xf32>
    %75 = vector.shape_cast %74 : vector<1x8x128xf32> to vector<8x128xf32>
    %76 = vector.shape_cast %54 : vector<8x128xf32> to vector<1x8x128xf32>
    tpu.vector_store %arg5[%c1_41, %c0_42, %c0_43], %76 {strides = array<i32>} : memref<4x8x128xf32, #tpu.memory_space<vmem>>, vector<1x8x128xf32>,
    %c2_44 = arith.constant 2 : index
    %c0_45 = arith.constant 0 : index
    %c0_46 = arith.constant 0 : index
    %77 = vector.load %arg5[%c2_44, %c0_45, %c0_46] : memref<4x8x128xf32, #tpu.memory_space<vmem>>, vector<1x8x128xf32>
    %78 = vector.shape_cast %77 : vector<1x8x128xf32> to vector<8x128xf32>
    %79 = vector.shape_cast %62 : vector<8x128xf32> to vector<1x8x128xf32>
    tpu.vector_store %arg5[%c2_44, %c0_45, %c0_46], %79 {strides = array<i32>} : memref<4x8x128xf32, #tpu.memory_space<vmem>>, vector<1x8x128xf32>,
    %c3_47 = arith.constant 3 : index
    %c0_48 = arith.constant 0 : index
    %c0_49 = arith.constant 0 : index
    %80 = vector.load %arg5[%c3_47, %c0_48, %c0_49] : memref<4x8x128xf32, #tpu.memory_space<vmem>>, vector<1x8x128xf32>
    %81 = vector.shape_cast %80 : vector<1x8x128xf32> to vector<8x128xf32>
    %82 = vector.shape_cast %70 : vector<8x128xf32> to vector<1x8x128xf32>
    tpu.vector_store %arg5[%c3_47, %c0_48, %c0_49], %82 {strides = array<i32>} : memref<4x8x128xf32, #tpu.memory_space<vmem>>, vector<1x8x128xf32>,
    %83 = arith.subf %62, %46 : vector<8x128xf32>
    %cst_50 = arith.constant 1.000000e+00 : f32
    %84 = vector.broadcast %cst_50 : f32 to vector<8x128xf32>
    %85 = arith.addf %83, %84 : vector<8x128xf32>
    %86 = arith.subf %70, %54 : vector<8x128xf32>
    %cst_51 = arith.constant 1.000000e+00 : f32
    %87 = vector.broadcast %cst_51 : f32 to vector<8x128xf32>
    %88 = arith.addf %86, %87 : vector<8x128xf32>
    %89 = tpu.iota {dimensions = array<i32: 0>} : vector<8x128xi32>
    %90 = tpu.iota {dimensions = array<i32: 1>} : vector<8x128xi32>
    %c8_i32 = arith.constant 8 : i32
    %91 = arith.muli %arg0, %c8_i32 : i32
    %92 = vector.broadcast %91 : i32 to vector<8x128xi32>
    %93 = arith.addi %92, %89 : vector<8x128xi32>
    %c128_i32 = arith.constant 128 : i32
    %94 = vector.broadcast %c128_i32 : i32 to vector<8x128xi32>
    %95 = arith.muli %93, %94 : vector<8x128xi32>
    %96 = arith.addi %95, %90 : vector<8x128xi32>
    %97 = vector.broadcast %2 : f32 to vector<8x128xf32>
    %98 = arith.cmpf oge, %85, %97 : vector<8x128xf32>
    %99 = vector.broadcast %2 : f32 to vector<8x128xf32>
    %100 = arith.cmpf oge, %88, %99 : vector<8x128xf32>
    %101 = arith.andi %98, %100 : vector<8x128xi1>
    %c576_i32 = arith.constant 576 : i32
    %102 = vector.broadcast %c576_i32 : i32 to vector<8x128xi32>
    %103 = arith.cmpi slt, %96, %102 : vector<8x128xi32>
    %104 = arith.andi %101, %103 : vector<8x128xi1>
    %c0_52 = arith.constant 0 : index
    %c0_53 = arith.constant 0 : index
    %105 = vector.load %arg4[%c0_52, %c0_53] : memref<8x128xf32, #tpu.memory_space<vmem>>, vector<8x128xf32>
    %cst_54 = arith.constant 0xFF800000 : f32
    %106 = vector.broadcast %cst_54 : f32 to vector<8x128xf32>
    %107 = arith.select %104, %105, %106 : vector<8x128xi1>, vector<8x128xf32>
    %c0_55 = arith.constant 0 : index
    %c0_56 = arith.constant 0 : index
    %108 = vector.load %arg6[%c0_55, %c0_56] : memref<8x128xf32, #tpu.memory_space<vmem>>, vector<8x128xf32>
    tpu.vector_store %arg6[%c0_55, %c0_56], %107 {strides = array<i32>} : memref<8x128xf32, #tpu.memory_space<vmem>>, vector<8x128xf32>,
    return
  }
  func.func @transform_0(%arg0: i32) -> i32 {
    %c0_i32 = arith.constant 0 : i32
    %c0_i32_0 = arith.constant 0 : i32
    return %c0_i32 : i32
  }
  func.func @transform_1(%arg0: i32) -> (i32, i32, i32) {
    %c0_i32 = arith.constant 0 : i32
    %c0_i32_0 = arith.constant 0 : i32
    %c0_i32_1 = arith.constant 0 : i32
    return %c0_i32, %arg0, %c0_i32_0 : i32, i32, i32
  }
  func.func @transform_2(%arg0: i32) -> (i32, i32, i32) {
    %c0_i32 = arith.constant 0 : i32
    %c0_i32_0 = arith.constant 0 : i32
    %c0_i32_1 = arith.constant 0 : i32
    return %c0_i32, %arg0, %c0_i32_0 : i32, i32, i32
  }
  func.func @transform_3(%arg0: i32) -> (i32, i32) {
    %c0_i32 = arith.constant 0 : i32
    %c0_i32_0 = arith.constant 0 : i32
    return %arg0, %c0_i32 : i32, i32
  }
  func.func @transform_4(%arg0: i32) -> (i32, i32, i32) {
    %c0_i32 = arith.constant 0 : i32
    %c0_i32_0 = arith.constant 0 : i32
    %c0_i32_1 = arith.constant 0 : i32
    return %c0_i32, %arg0, %c0_i32_0 : i32, i32, i32
  }
  func.func @transform_5(%arg0: i32) -> (i32, i32) {
    %c0_i32 = arith.constant 0 : i32
    %c0_i32_0 = arith.constant 0 : i32
    return %arg0, %c0_i32 : i32, i32
  }
}

</mosaic_0001>

<llo_original>
// kernel: _proposal_device.1
$region0: #{_proposal_device.1}
  #allocation0 [shape = 'u32[]', space=smem, size = 0x4, offset = 0x4, fixed_abs, tag = 'smem constant byte address 0x4 - core index']
  #allocation1 [shape = 'u32[144,128]{1,0:T(1,128)}', space=vmem, size = 0x12000, scoped, tag = 'internal scratch']
  %s0 = inlined_call_operand.vmem [shape: f32[3], index: 0, kind: input, shape index: {}]
  %s1 = inlined_call_operand.vmem [shape: f32[4,8,128], index: 1, kind: input, shape index: {}]
  %s2 = inlined_call_operand.vmem [shape: f32[4,8,128], index: 2, kind: input, shape index: {}]
  %s3 = inlined_call_operand.vmem [shape: f32[8,128], index: 3, kind: input, shape index: {}]
  %s4 = inlined_call_operand.vmem [shape: f32[4,8,128], index: 4, kind: output, shape index: {0}]
  %s5 = inlined_call_operand.vmem [shape: f32[8,128], index: 5, kind: output, shape index: {1}]
  %6 = xla_tuple %s4, %s5
  %s7 = sld [smem:[#allocation0]]
  $region38: #{_proposal_device.1} parent=0
    _
  %s9 = ssub.s32 1, %s7
  %s10 = scalar_select 0, %s9, %s7
  $region1: #{_proposal_device.1} parent=0
    #allocation2 [shape = 'u8[512]{0}', space=smem, size = 0x200, scoped, tag = 'input window, operand 0, single buffered']
    #allocation3 [shape = 's32[1]{0}', space=sflag, size = 0x4, scoped, tag = 'scoped memory for _proposal_device.1']
    %11 = vsyncpa [#allocation3], 0
    // Predicated region
    $region2: #{_proposal_device.1} parent=1 // pred_check
      _
    $region3: #{_proposal_device.1} parent=1 // pred_check_branch
      %13 = sbr.rel (0) target = $region5
    $region4: #{_proposal_device.1} parent=1 // pred_region
      %s15 = ssub.s32 16, 16
      %16 = vsyncadd [#allocation3], %s15
      %s18 = sshll.u32 %s0, 4
      %s19 = int_to_ptr.vmem [resolvable:$true] %s18
      %21 = dma.vmem_to_smem %s19, 16, [#allocation2], [#allocation3]
    $region5: #{_proposal_device.1} parent=1 // pred_fallthru
      _
    // Predicated region
    $region6: #{_proposal_device.1} parent=1 // pred_check
      _
    $region7: #{_proposal_device.1} parent=1 // pred_check_branch
      %23 = sbr.rel (0) target = $region9
    $region8: #{_proposal_device.1} parent=1 // pred_region
      _
    $region9: #{_proposal_device.1} parent=1 // pred_fallthru
      _
    // Predicated region
    $region10: #{_proposal_device.1} parent=1 // pred_check
      _
    $region11: #{_proposal_device.1} parent=1 // pred_check_branch
      %25 = sbr.rel (0) target = $region13
    $region12: #{_proposal_device.1} parent=1 // pred_region
      _
    $region13: #{_proposal_device.1} parent=1 // pred_fallthru
      _
    // Predicated region
    $region14: #{_proposal_device.1} parent=1 // pred_check
      _
    $region15: #{_proposal_device.1} parent=1 // pred_check_branch
      %27 = sbr.rel (0) target = $region17
    $region16: #{_proposal_device.1} parent=1 // pred_region
      _
    $region17: #{_proposal_device.1} parent=1 // pred_fallthru
      _
    // Predicated region
    $region18: #{_proposal_device.1} parent=1 // pred_check
      _
    $region19: #{_proposal_device.1} parent=1 // pred_check_branch
      %29 = sbr.rel (0) target = $region21
    $region20: #{_proposal_device.1} parent=1 // pred_region
      %30 = dma.done [#allocation3], 16
    $region21: #{_proposal_device.1} parent=1 // pred_fallthru
      _
    %31 = sfence
    %s32 = sld [smem:[#allocation2]]
    %s33 = sld [smem:[#allocation2 + $0x1]]
    %s34 = sld [smem:[#allocation2 + $0x2]]
    %v35 = vld [vmem:[%s1] sm:$0xff]
    %s36 = scalar_lea.vmem %s1, 8
    %v37 = vld [vmem:[%s36] sm:$0xff]
    %s38 = scalar_lea.vmem %s1, 16
    %v39 = vld [vmem:[%s38] sm:$0xff]
    %s40 = scalar_lea.vmem %s1, 24
    %v41 = vld [vmem:[%s40] sm:$0xff]
    %v42 = vld [vmem:[%s2] sm:$0xff]
    %s43 = scalar_lea.vmem %s2, 8
    %v44 = vld [vmem:[%s43] sm:$0xff]
    %s45 = scalar_lea.vmem %s2, 16
    %v46 = vld [vmem:[%s45] sm:$0xff]
    %s47 = scalar_lea.vmem %s2, 24
    %v48 = vld [vmem:[%s47] sm:$0xff]
    %v49 = vsub.f32 %v39, %v35
    %v50 = vadd.f32 %v49, 1.0
    %v51 = vsub.f32 %v41, %v37
    %v52 = vadd.f32 %v51, 1.0
    %v53 = vmul.f32 %v50, 0.5
    %v54 = vadd.f32 %v35, %v53
    %v55 = vmul.f32 %v52, 0.5
    %v56 = vadd.f32 %v37, %v55
    %v57 = vmul.f32 %v42, %v50
    %v58 = vadd.f32 %v57, %v54
    %v59 = vmul.f32 %v44, %v52
    %v60 = vadd.f32 %v59, %v56
    %v61 = vmul.f32 %v46, 1.442695
    %v62 = vpow.pop %v61
    %v63 = vmul.f32 %v62, %v50
    %v64 = vmul.f32 %v48, 1.442695
    %v65 = vpow.pop %v64
    %v66 = vmul.f32 %v65, %v52
    %v67 = vmul.f32 %v63, 0.5
    %v68 = vsub.f32 %v58, %v67
    %s69 = ssub.f32 %s33, 1.0
    %v70 = vmax.f32 %v68, 0.0
    %v71 = vstv %s69
    %v72 = vmin.f32 %v71, %v70
    %v73 = vmul.f32 %v66, 0.5
    %v74 = vsub.f32 %v60, %v73
    %s75 = ssub.f32 %s32, 1.0
    %v76 = vmax.f32 %v74, 0.0
    %v77 = vstv %s75
    %v78 = vmin.f32 %v77, %v76
    %v79 = vadd.f32 %v58, %v67
    %v80 = vmax.f32 %v79, 0.0
    %v81 = vmin.f32 %v71, %v80
    %v82 = vadd.f32 %v60, %v73
    %v83 = vmax.f32 %v82, 0.0
    %v84 = vmin.f32 %v77, %v83
    %85 = vst [vmem:[%s4] sm:$0xff] %v72
    %s86 = scalar_lea.vmem %s4, 8
    %87 = vst [vmem:[%s86] sm:$0xff] %v78
    %s88 = scalar_lea.vmem %s4, 16
    %89 = vst [vmem:[%s88] sm:$0xff] %v81
    %s90 = scalar_lea.vmem %s4, 24
    %91 = vst [vmem:[%s90] sm:$0xff] %v84
    %v92 = vsub.f32 %v81, %v72
    %v93 = vadd.f32 %v92, 1.0
    %v94 = vsub.f32 %v84, %v78
    %v95 = vadd.f32 %v94, 1.0
    %v96 = vlaneseq
    %v97 = vshrl.u32 %v96, 7
    %v98 = vlaneseq
    %v99 = vand.u32 %v98, 127
    %s100 = smul.u32 0, 8
    %v101 = vstv %s100
    %v102 = vadd.s32 %v101, %v97
    %v103 = vmul.u32 %v102, 128
    %v104 = vadd.s32 %v103, %v99
    %v105 = vstv %s34
    %vm106 = vcmp.ge.f32.partialorder %v93, %v105
    %vm107 = vcmp.ge.f32.partialorder %v95, %v105
    %vm108 = vmand %vm106, %vm107
    %vm109 = vcmp.lt.s32.totalorder %v104, 576
    %vm110 = vmand %vm108, %vm109
    %v111 = vld [vmem:[%s3] sm:$0xff]
    %v112 = vsel %vm110, %v111, -inf
    %113 = vst [vmem:[%s5] sm:$0xff] %v112
    // Predicated region
    $region22: #{_proposal_device.1} parent=1 // pred_check
      _
    $region23: #{_proposal_device.1} parent=1 // pred_check_branch
      %115 = sbr.rel (0) target = $region25
    $region24: #{_proposal_device.1} parent=1 // pred_region
      _
    $region25: #{_proposal_device.1} parent=1 // pred_fallthru
      _
    // Predicated region
    $region26: #{_proposal_device.1} parent=1 // pred_check
      _
    $region27: #{_proposal_device.1} parent=1 // pred_check_branch
      %117 = sbr.rel (0) target = $region29
    $region28: #{_proposal_device.1} parent=1 // pred_region
      _
    $region29: #{_proposal_device.1} parent=1 // pred_fallthru
      _
    // Predicated region
    $region30: #{_proposal_device.1} parent=1 // pred_check
      _
    $region31: #{_proposal_device.1} parent=1 // pred_check_branch
      %119 = sbr.rel (0) target = $region33
    $region32: #{_proposal_device.1} parent=1 // pred_region
      _
    $region33: #{_proposal_device.1} parent=1 // pred_fallthru
      _
    // Predicated region
    $region34: #{_proposal_device.1} parent=1 // pred_check
      _
    $region35: #{_proposal_device.1} parent=1 // pred_check_branch
      %121 = sbr.rel (0) target = $region37
    $region36: #{_proposal_device.1} parent=1 // pred_region
      _
    $region37: #{_proposal_device.1} parent=1 // pred_fallthru
      _
    %122 = vsyncpa [#allocation3], 1

</llo_original>
